<compile_context>
chip_gen: v6e
topology: v6e:2x2x1
jax: 0.10.0
libtpu: 0.0.40
codegen_flags: <defaults>
</compile_context>

<pallas_src>
import math

import numpy as np
import jax
import jax.numpy as jnp
from jax import lax
from jax.experimental import pallas as pl
from jax.experimental.pallas import tpu as pltpu


def _round_up(x, m):
    return ((x + m - 1) // m) * m


# ----------------------------------------------------------------------------
# Fused per-(batch, head) kernel: projections + attention + out-proj accumulate
# ----------------------------------------------------------------------------
def _head_attn_kernel(x_v_ref, x_c_ref, mask_ref,
                      wqp_ref, wkp_ref, wv_ref, wqc_ref, wkc_ref,
                      wo_ref, b_out_ref, o_ref):
    # x_v_ref  : (1, N, Dv)      bf16
    # x_c_ref  : (1, N, Dc)      bf16
    # mask_ref : (1, 1, N)       f32, 1.0 = attend
    # wqp/wkp/wv : (1, Dv, Dh)   bf16 (scale folded into wqp)
    # wqc/wkc  : (1, Dc, Dh)     bf16 (rel_pos_scale folded into wqc)
    # wo_ref   : (1, Dh, Dv_pad) bf16 per-head output-projection slab
    # b_out_ref: (1, Dv_pad)     f32
    # o_ref    : (1, N, Dv_pad)  f32 accumulator, resident across the head axis
    h = pl.program_id(1)

    # Output block index map ignores h -> block stays in VMEM across heads.
    # Initialize the accumulator with the output-projection bias once per batch.
    @pl.when(h == 0)
    def _():
        o_ref[0] = jnp.broadcast_to(b_out_ref[...], o_ref.shape[1:]).astype(o_ref.dtype)

    x_v = x_v_ref[0]                                   # (N, Dv) bf16
    x_c = x_c_ref[0]                                   # (N, Dc) bf16

    # Per-head projections: bf16 MXU operands, f32 accumulation.
    qp = jnp.dot(x_v, wqp_ref[0], preferred_element_type=jnp.float32)   # (N, Dh)
    kp = jnp.dot(x_v, wkp_ref[0], preferred_element_type=jnp.float32)
    v = jnp.dot(x_v, wv_ref[0], preferred_element_type=jnp.float32)
    qc = jnp.dot(x_c, wqc_ref[0], preferred_element_type=jnp.float32)
    kc = jnp.dot(x_c, wkc_ref[0], preferred_element_type=jnp.float32)

    # Scores = qp.kp^T + qc.kc^T  (contraction over Dh, no in-kernel transpose).
    dn = (((1,), (1,)), ((), ()))
    dots = lax.dot_general(qp.astype(jnp.bfloat16), kp.astype(jnp.bfloat16), dn,
                           preferred_element_type=jnp.float32)           # (N, N)
    dots = dots + lax.dot_general(qc.astype(jnp.bfloat16), kc.astype(jnp.bfloat16), dn,
                                  preferred_element_type=jnp.float32)

    # Additive mask bias (f32): 0 where attend, -1e30 where masked out.
    dots = dots + (mask_ref[0] - 1.0) * 1e30

    # Softmax in f32 (VPU/EUP); deferred normalization.
    m = jnp.max(dots, axis=-1, keepdims=True)
    p = jnp.exp(dots - m)
    denom = jnp.sum(p, axis=-1, keepdims=True)
    inv = pl.reciprocal(denom, approx=True)
    inv = inv * (2.0 - denom * inv)                    # one Newton step -> f32 accuracy

    oh = jnp.dot(p.astype(jnp.bfloat16), v.astype(jnp.bfloat16),
                 preferred_element_type=jnp.float32) * inv               # (N, Dh)

    # Accumulate this head straight into the output projection (no head concat).
    o_ref[0] += jnp.dot(oh.astype(jnp.bfloat16), wo_ref[0],
                        preferred_element_type=jnp.float32).astype(o_ref.dtype)


# ----------------------------------------------------------------------------
# Weight preparation (done once outside the kernel, tiny)
# ----------------------------------------------------------------------------
def build_head_weights(params, num_heads, dv_pad):
    """Per-head weight stacks with scales folded into Q weights.

    Returns bf16 stacks (H, Dv, Dh)x3, (H, Dc, Dh)x2, (H, Dh, dv_pad) and the
    f32 bias (1, dv_pad). The output-projection weight is padded along the
    channel dim to dv_pad so the kernel's stores are lane-dense.
    """
    w_qkv = params["w_qkv"]            # (Dv, 3*inner)
    w_qkc = params["w_qk_coords"]      # (Dc, 2*inner)
    w_out = params["w_out"]            # (inner, Dv)
    inner = w_qkv.shape[1] // 3
    H = num_heads
    Dh = inner // H
    scale = Dh ** -0.5
    rel_scale = Dh ** -0.5             # rel_pos_dim_head == dim_head in the module

    def heads_leading(w):              # (din, inner) -> (H, din, Dh)
        din = w.shape[0]
        return w.reshape(din, H, Dh).transpose(1, 0, 2)

    w_qp = heads_leading(w_qkv[:, 0 * inner:1 * inner]) * scale
    w_kp = heads_leading(w_qkv[:, 1 * inner:2 * inner])
    w_v = heads_leading(w_qkv[:, 2 * inner:3 * inner])
    w_qc = heads_leading(w_qkc[:, 0 * inner:1 * inner]) * rel_scale
    w_kc = heads_leading(w_qkc[:, 1 * inner:2 * inner])

    dv_out = w_out.shape[1]
    w_o = w_out.reshape(H, Dh, dv_out)
    b_o = params["b_out"]
    if dv_pad != dv_out:
        w_o = jnp.pad(w_o, ((0, 0), (0, 0), (0, dv_pad - dv_out)))
        b_o = jnp.pad(b_o, (0, dv_pad - dv_out))
    b_o = b_o.reshape(1, dv_pad).astype(jnp.float32)

    bf = jnp.bfloat16
    return (w_qp.astype(bf), w_kp.astype(bf), w_v.astype(bf),
            w_qc.astype(bf), w_kc.astype(bf), w_o.astype(bf), b_o)


# ----------------------------------------------------------------------------
# Module forward
# ----------------------------------------------------------------------------
def init_params(key, values_dim, coords_dim, inner_dim):
    """nn.Linear-style init (uniform +-1/sqrt(fan_in)); weights stored (in, out)."""
    k1, k2, k3, k4 = jax.random.split(key, 4)
    b1 = 1.0 / math.sqrt(values_dim)
    b2 = 1.0 / math.sqrt(coords_dim)
    b3 = 1.0 / math.sqrt(inner_dim)
    return {
        "w_qkv": jax.random.uniform(k1, (values_dim, inner_dim * 3),
                                    jnp.float32, -b1, b1),
        "w_qk_coords": jax.random.uniform(k2, (coords_dim, inner_dim * 2),
                                          jnp.float32, -b2, b2),
        "w_out": jax.random.uniform(k3, (inner_dim, values_dim),
                                    jnp.float32, -b3, b3),
        "b_out": jax.random.uniform(k4, (values_dim,), jnp.float32, -b3, b3),
    }


def values_coords_attention_internal(params, values, coords,
                                     attention_mask=None, num_heads=8):
    B, N, Dv = values.shape
    Dc = coords.shape[-1]
    inner_dim = params["w_qkv"].shape[1] // 3
    H = num_heads
    Dh = inner_dim // H
    dv_pad = _round_up(Dv, 128)        # lane-dense output store

    (w_qp, w_kp, w_v, w_qc, w_kc, w_o, b_o) = build_head_weights(params, H, dv_pad)

    # bf16 MXU operands (cast once here); mask / softmax / accumulator stay f32.
    x_v = values.astype(jnp.bfloat16)
    x_c = coords.astype(jnp.bfloat16)
    if attention_mask is None:
        mask = jnp.ones((B, 1, N), jnp.float32)
    else:
        mask = attention_mask.astype(jnp.float32).reshape(B, 1, N)

    flops = 2 * B * H * (
        N * Dv * Dh * 3 + N * Dc * Dh * 2   # per-head projections
        + 2 * N * N * Dh                    # two score terms
        + N * N * Dh                        # P @ V
        + N * Dh * dv_pad)                  # output projection accumulate
    cost = pl.CostEstimate(
        flops=flops,
        transcendentals=B * H * N * N,
        bytes_accessed=int(
            2 * (x_v.size + x_c.size)
            + 4 * mask.size
            + 2 * (w_qp.size + w_kp.size + w_v.size + w_qc.size + w_kc.size + w_o.size)
            + 4 * b_o.size
            + 4 * B * N * dv_pad))

    out = pl.pallas_call(
        _head_attn_kernel,
        out_shape=jax.ShapeDtypeStruct((B, N, dv_pad), jnp.float32),
        grid=(B, H),
        in_specs=[
            pl.BlockSpec((1, N, Dv), lambda b, h: (b, 0, 0)),       # values (bf16)
            pl.BlockSpec((1, N, Dc), lambda b, h: (b, 0, 0)),       # coords (bf16)
            pl.BlockSpec((1, 1, N), lambda b, h: (b, 0, 0)),        # mask   (f32)
            pl.BlockSpec((1, Dv, Dh), lambda b, h: (h, 0, 0)),      # w_qp (scaled)
            pl.BlockSpec((1, Dv, Dh), lambda b, h: (h, 0, 0)),      # w_kp
            pl.BlockSpec((1, Dv, Dh), lambda b, h: (h, 0, 0)),      # w_v
            pl.BlockSpec((1, Dc, Dh), lambda b, h: (h, 0, 0)),      # w_qc (scaled)
            pl.BlockSpec((1, Dc, Dh), lambda b, h: (h, 0, 0)),      # w_kc
            pl.BlockSpec((1, Dh, dv_pad), lambda b, h: (h, 0, 0)),  # w_out per head
            pl.BlockSpec((1, dv_pad), lambda b, h: (0, 0)),         # b_out
        ],
        out_specs=pl.BlockSpec((1, N, dv_pad), lambda b, h: (b, 0, 0)),
        compiler_params=pltpu.CompilerParams(
            dimension_semantics=("parallel", "arbitrary"),
            vmem_limit_bytes=32 * 1024 * 1024),
        cost_estimate=cost,
    )(x_v, x_c, mask, w_qp, w_kp, w_v, w_qc, w_kc, w_o, b_o)

    out = out.astype(values.dtype)
    if dv_pad != Dv:
        out = out[..., :Dv]
    return out


# ----------------------------------------------------------------------------
# Pure-JAX reference (mirrors the PyTorch module, f32)
# ----------------------------------------------------------------------------
def ref_forward(params, values, coords, mask, num_heads):
    B, N, _ = values.shape
    inner_dim = params["w_qkv"].shape[1] // 3
    H = num_heads
    Dh = inner_dim // H
    scale = Dh ** -0.5
    rel_scale = Dh ** -0.5

    qkv = values @ params["w_qkv"]
    qp, kp, v = jnp.split(qkv, 3, axis=-1)
    qkc = coords @ params["w_qk_coords"]
    qc, kc = jnp.split(qkc, 2, axis=-1)

    def to_heads(x):
        return x.reshape(B, N, H, Dh).transpose(0, 2, 1, 3)   # (B, H, N, Dh)

    qp, kp, v, qc, kc = map(to_heads, (qp, kp, v, qc, kc))
    dots = jnp.einsum("bhqd,bhkd->bhqk", qp, kp) * scale
    dots = dots + jnp.einsum("bhqd,bhkd->bhqk", qc, kc) * rel_scale
    dots = jnp.where(mask[:, None, None, :] > 0, dots, -jnp.inf)
    attn = jax.nn.softmax(dots, axis=-1)
    out = jnp.einsum("bhqk,bhkd->bhqd", attn, v)
    out = out.transpose(0, 2, 1, 3).reshape(B, N, inner_dim)
    return out @ params["w_out"] + params["b_out"]


# ----------------------------------------------------------------------------
if __name__ == "__main__":
    B = 2
    N = 8
    values_dim = 16
    coords_dim = 8
    inner_dim = 32
    num_heads = 4

    key = jax.random.PRNGKey(0)
    kparam, kvals, kcrds, kmask = jax.random.split(key, 4)
    params = init_params(kparam, values_dim, coords_dim, inner_dim)

    values = jax.random.normal(kvals, (B, N, values_dim), jnp.float32)
    coords = jax.random.normal(kcrds, (B, N, coords_dim), jnp.float32)
    # mask out a few keys; keep at least one unmasked key per batch
    mask = (jax.random.uniform(kmask, (B, N)) > 0.25).astype(jnp.float32)
    mask = mask.at[:, 0].set(1.0)

    out = values_coords_attention_internal(params, values, coords, mask, num_heads)
    out = jax.block_until_ready(out)

    ref = ref_forward(params, values, coords, mask, num_heads)
    # bf16 MXU operands -> relax tolerance vs the f32 reference.
    np.testing.assert_allclose(np.asarray(out), np.asarray(ref),
                               rtol=3e-2, atol=3e-2)
    assert out.shape == (B, N, values_dim)
    print("KERNEL_OK")
</pallas_src>

<mosaic_0001>
module attributes {stable_mosaic.version = 11 : i64} {
  func.func @_head_attn_kernel(%arg0: i32, %arg1: i32, %arg2: memref<1x8x16xbf16, #tpu.memory_space<vmem>>, %arg3: memref<1x8x8xbf16, #tpu.memory_space<vmem>>, %arg4: memref<1x1x8xf32, #tpu.memory_space<vmem>>, %arg5: memref<1x16x8xbf16, #tpu.memory_space<vmem>>, %arg6: memref<1x16x8xbf16, #tpu.memory_space<vmem>>, %arg7: memref<1x16x8xbf16, #tpu.memory_space<vmem>>, %arg8: memref<1x8x8xbf16, #tpu.memory_space<vmem>>, %arg9: memref<1x8x8xbf16, #tpu.memory_space<vmem>>, %arg10: memref<1x8x128xbf16, #tpu.memory_space<vmem>>, %arg11: memref<1x128xf32, #tpu.memory_space<vmem>>, %arg12: memref<1x8x128xf32, #tpu.memory_space<vmem>>) attributes {dimension_semantics = [#tpu.dimension_semantics<parallel>, #tpu.dimension_semantics<arbitrary>], iteration_bounds = array<i64: 2, 4>, scalar_prefetch = 0 : i64, scratch_operands = 0 : i64, tpu.core_type = #tpu.core_type<tc>, window_params = [{transform_indices = @transform_0, window_bounds = array<i64: 1, 8, 16>}, {transform_indices = @transform_1, window_bounds = array<i64: 1, 8, 8>}, {transform_indices = @transform_2, window_bounds = array<i64: 1, 1, 8>}, {transform_indices = @transform_3, window_bounds = array<i64: 1, 16, 8>}, {transform_indices = @transform_4, window_bounds = array<i64: 1, 16, 8>}, {transform_indices = @transform_5, window_bounds = array<i64: 1, 16, 8>}, {transform_indices = @transform_6, window_bounds = array<i64: 1, 8, 8>}, {transform_indices = @transform_7, window_bounds = array<i64: 1, 8, 8>}, {transform_indices = @transform_8, window_bounds = array<i64: 1, 8, 128>}, {pipeline_mode = #tpu.pipeline_mode<synchronous>, transform_indices = @transform_9, window_bounds = array<i64: 1, 128>}, {transform_indices = @transform_10, window_bounds = array<i64: 1, 8, 128>}]} {
    %c0_i32 = arith.constant 0 : i32
    %0 = arith.cmpi eq, %arg1, %c0_i32 : i32
    %1 = arith.extui %0 : i1 to i32
    %c0_i32_0 = arith.constant 0 : i32
    %2 = arith.cmpi ne, %1, %c0_i32_0 : i32
    scf.if %2 {
      %c0_46 = arith.constant 0 : index
      %c0_47 = arith.constant 0 : index
      %64 = vector.load %arg11[%c0_46, %c0_47] : memref<1x128xf32, #tpu.memory_space<vmem>>, vector<1x128xf32>
      %65 = vector.shape_cast %64 : vector<1x128xf32> to vector<1x128xf32>
      %66 = vector.broadcast %65 : vector<1x128xf32> to vector<8x128xf32>
      %c0_48 = arith.constant 0 : index
      %c0_49 = arith.constant 0 : index
      %c0_50 = arith.constant 0 : index
      %67 = vector.load %arg12[%c0_48, %c0_49, %c0_50] : memref<1x8x128xf32, #tpu.memory_space<vmem>>, vector<1x8x128xf32>
      %68 = vector.shape_cast %67 : vector<1x8x128xf32> to vector<8x128xf32>
      %69 = vector.shape_cast %66 : vector<8x128xf32> to vector<1x8x128xf32>
      tpu.vector_store %arg12[%c0_48, %c0_49, %c0_50], %69 {strides = array<i32>} : memref<1x8x128xf32, #tpu.memory_space<vmem>>, vector<1x8x128xf32>,
    } else {
    }
    %c0 = arith.constant 0 : index
    %c0_1 = arith.constant 0 : index
    %c0_2 = arith.constant 0 : index
    %3 = vector.load %arg2[%c0, %c0_1, %c0_2] : memref<1x8x16xbf16, #tpu.memory_space<vmem>>, vector<1x8x16xbf16>
    %4 = vector.shape_cast %3 : vector<1x8x16xbf16> to vector<8x16xbf16>
    %c0_3 = arith.constant 0 : index
    %c0_4 = arith.constant 0 : index
    %c0_5 = arith.constant 0 : index
    %5 = vector.load %arg3[%c0_3, %c0_4, %c0_5] : memref<1x8x8xbf16, #tpu.memory_space<vmem>>, vector<1x8x8xbf16>
    %6 = vector.shape_cast %5 : vector<1x8x8xbf16> to vector<8x8xbf16>
    %c0_6 = arith.constant 0 : index
    %c0_7 = arith.constant 0 : index
    %c0_8 = arith.constant 0 : index
    %7 = vector.load %arg5[%c0_6, %c0_7, %c0_8] : memref<1x16x8xbf16, #tpu.memory_space<vmem>>, vector<1x16x8xbf16>
    %8 = vector.shape_cast %7 : vector<1x16x8xbf16> to vector<16x8xbf16>
    %cst = arith.constant dense<0.000000e+00> : vector<8x8xf32>
    %9 = tpu.matmul %4, %8, %cst {dimension_numbers = #tpu.dot_dimension_numbers<[1], [0], [0], [1], [0, 0, 1, 1], [], []>} : vector<8x16xbf16>, vector<16x8xbf16>, vector<8x8xf32> -> vector<8x8xf32>
    %c0_9 = arith.constant 0 : index
    %c0_10 = arith.constant 0 : index
    %c0_11 = arith.constant 0 : index
    %10 = vector.load %arg6[%c0_9, %c0_10, %c0_11] : memref<1x16x8xbf16, #tpu.memory_space<vmem>>, vector<1x16x8xbf16>
    %11 = vector.shape_cast %10 : vector<1x16x8xbf16> to vector<16x8xbf16>
    %cst_12 = arith.constant dense<0.000000e+00> : vector<8x8xf32>
    %12 = tpu.matmul %4, %11, %cst_12 {dimension_numbers = #tpu.dot_dimension_numbers<[1], [0], [0], [1], [0, 0, 1, 1], [], []>} : vector<8x16xbf16>, vector<16x8xbf16>, vector<8x8xf32> -> vector<8x8xf32>
    %c0_13 = arith.constant 0 : index
    %c0_14 = arith.constant 0 : index
    %c0_15 = arith.constant 0 : index
    %13 = vector.load %arg7[%c0_13, %c0_14, %c0_15] : memref<1x16x8xbf16, #tpu.memory_space<vmem>>, vector<1x16x8xbf16>
    %14 = vector.shape_cast %13 : vector<1x16x8xbf16> to vector<16x8xbf16>
    %cst_16 = arith.constant dense<0.000000e+00> : vector<8x8xf32>
    %15 = tpu.matmul %4, %14, %cst_16 {dimension_numbers = #tpu.dot_dimension_numbers<[1], [0], [0], [1], [0, 0, 1, 1], [], []>} : vector<8x16xbf16>, vector<16x8xbf16>, vector<8x8xf32> -> vector<8x8xf32>
    %c0_17 = arith.constant 0 : index
    %c0_18 = arith.constant 0 : index
    %c0_19 = arith.constant 0 : index
    %16 = vector.load %arg8[%c0_17, %c0_18, %c0_19] : memref<1x8x8xbf16, #tpu.memory_space<vmem>>, vector<1x8x8xbf16>
    %17 = vector.shape_cast %16 : vector<1x8x8xbf16> to vector<8x8xbf16>
    %cst_20 = arith.constant dense<0.000000e+00> : vector<8x8xf32>
    %18 = tpu.matmul %6, %17, %cst_20 {dimension_numbers = #tpu.dot_dimension_numbers<[1], [0], [0], [1], [0, 0, 1, 1], [], []>} : vector<8x8xbf16>, vector<8x8xbf16>, vector<8x8xf32> -> vector<8x8xf32>
    %c0_21 = arith.constant 0 : index
    %c0_22 = arith.constant 0 : index
    %c0_23 = arith.constant 0 : index
    %19 = vector.load %arg9[%c0_21, %c0_22, %c0_23] : memref<1x8x8xbf16, #tpu.memory_space<vmem>>, vector<1x8x8xbf16>
    %20 = vector.shape_cast %19 : vector<1x8x8xbf16> to vector<8x8xbf16>
    %cst_24 = arith.constant dense<0.000000e+00> : vector<8x8xf32>
    %21 = tpu.matmul %6, %20, %cst_24 {dimension_numbers = #tpu.dot_dimension_numbers<[1], [0], [0], [1], [0, 0, 1, 1], [], []>} : vector<8x8xbf16>, vector<8x8xbf16>, vector<8x8xf32> -> vector<8x8xf32>
    %22 = arith.truncf %9 : vector<8x8xf32> to vector<8x8xbf16>
    %23 = arith.truncf %12 : vector<8x8xf32> to vector<8x8xbf16>
    %cst_25 = arith.constant dense<0.000000e+00> : vector<8x8xf32>
    %24 = tpu.matmul %22, %23, %cst_25 {dimension_numbers = #tpu.dot_dimension_numbers<[1], [1], [0], [0], [0, 0, 1, 0], [], []>} : vector<8x8xbf16>, vector<8x8xbf16>, vector<8x8xf32> -> vector<8x8xf32>
    %25 = arith.truncf %18 : vector<8x8xf32> to vector<8x8xbf16>
    %26 = arith.truncf %21 : vector<8x8xf32> to vector<8x8xbf16>
    %cst_26 = arith.constant dense<0.000000e+00> : vector<8x8xf32>
    %27 = tpu.matmul %25, %26, %cst_26 {dimension_numbers = #tpu.dot_dimension_numbers<[1], [1], [0], [0], [0, 0, 1, 0], [], []>} : vector<8x8xbf16>, vector<8x8xbf16>, vector<8x8xf32> -> vector<8x8xf32>
    %28 = arith.addf %24, %27 : vector<8x8xf32>
    %c0_27 = arith.constant 0 : index
    %c0_28 = arith.constant 0 : index
    %c0_29 = arith.constant 0 : index
    %29 = vector.load %arg4[%c0_27, %c0_28, %c0_29] : memref<1x1x8xf32, #tpu.memory_space<vmem>>, vector<1x1x8xf32>
    %30 = vector.shape_cast %29 : vector<1x1x8xf32> to vector<1x8xf32>
    %cst_30 = arith.constant 1.000000e+00 : f32
    %31 = vector.broadcast %cst_30 : f32 to vector<1x8xf32>
    %32 = arith.subf %30, %31 : vector<1x8xf32>
    %cst_31 = arith.constant 1.000000e+30 : f32
    %33 = vector.broadcast %cst_31 : f32 to vector<1x8xf32>
    %34 = arith.mulf %32, %33 : vector<1x8xf32>
    %35 = vector.broadcast %34 : vector<1x8xf32> to vector<8x8xf32>
    %36 = arith.addf %28, %35 : vector<8x8xf32>
    %cst_32 = arith.constant dense<0xFF800000> : vector<8xf32>
    %37 = vector.multi_reduction <maximumf>, %36, %cst_32 [1] : vector<8x8xf32> to vector<8xf32>
    %38 = vector.shape_cast %37 : vector<8xf32> to vector<8x1xf32>
    %39 = vector.broadcast %38 : vector<8x1xf32> to vector<8x8xf32>
    %40 = arith.subf %36, %39 : vector<8x8xf32>
    %41 = math.exp %40 : vector<8x8xf32>
    %cst_33 = arith.constant dense<0.000000e+00> : vector<8xf32>
    %42 = vector.multi_reduction <add>, %41, %cst_33 [1] : vector<8x8xf32> to vector<8xf32>
    %43 = vector.shape_cast %42 : vector<8xf32> to vector<8x1xf32>
    %44 = tpu.reciprocal %43 {approx = true} : vector<8x1xf32> -> vector<8x1xf32>
    %45 = arith.mulf %43, %44 : vector<8x1xf32>
    %cst_34 = arith.constant 2.000000e+00 : f32
    %46 = vector.broadcast %cst_34 : f32 to vector<8x1xf32>
    %47 = arith.subf %46, %45 : vector<8x1xf32>
    %48 = arith.mulf %44, %47 : vector<8x1xf32>
    %49 = arith.truncf %41 : vector<8x8xf32> to vector<8x8xbf16>
    %50 = arith.truncf %15 : vector<8x8xf32> to vector<8x8xbf16>
    %cst_35 = arith.constant dense<0.000000e+00> : vector<8x8xf32>
    %51 = tpu.matmul %49, %50, %cst_35 {dimension_numbers = #tpu.dot_dimension_numbers<[1], [0], [0], [1], [0, 0, 1, 1], [], []>} : vector<8x8xbf16>, vector<8x8xbf16>, vector<8x8xf32> -> vector<8x8xf32>
    %52 = vector.broadcast %48 : vector<8x1xf32> to vector<8x8xf32>
    %53 = arith.mulf %51, %52 : vector<8x8xf32>
    %c0_36 = arith.constant 0 : index
    %c0_37 = arith.constant 0 : index
    %c0_38 = arith.constant 0 : index
    %54 = vector.load %arg12[%c0_36, %c0_37, %c0_38] : memref<1x8x128xf32, #tpu.memory_space<vmem>>, vector<1x8x128xf32>
    %55 = vector.shape_cast %54 : vector<1x8x128xf32> to vector<8x128xf32>
    %56 = arith.truncf %53 : vector<8x8xf32> to vector<8x8xbf16>
    %c0_39 = arith.constant 0 : index
    %c0_40 = arith.constant 0 : index
    %c0_41 = arith.constant 0 : index
    %57 = vector.load %arg10[%c0_39, %c0_40, %c0_41] : memref<1x8x128xbf16, #tpu.memory_space<vmem>>, vector<1x8x128xbf16>
    %58 = vector.shape_cast %57 : vector<1x8x128xbf16> to vector<8x128xbf16>
    %cst_42 = arith.constant dense<0.000000e+00> : vector<8x128xf32>
    %59 = tpu.matmul %56, %58, %cst_42 {dimension_numbers = #tpu.dot_dimension_numbers<[1], [0], [0], [1], [0, 0, 1, 1], [], []>} : vector<8x8xbf16>, vector<8x128xbf16>, vector<8x128xf32> -> vector<8x128xf32>
    %60 = arith.addf %55, %59 : vector<8x128xf32>
    %c0_43 = arith.constant 0 : index
    %c0_44 = arith.constant 0 : index
    %c0_45 = arith.constant 0 : index
    %61 = vector.load %arg12[%c0_43, %c0_44, %c0_45] : memref<1x8x128xf32, #tpu.memory_space<vmem>>, vector<1x8x128xf32>
    %62 = vector.shape_cast %61 : vector<1x8x128xf32> to vector<8x128xf32>
    %63 = vector.shape_cast %60 : vector<8x128xf32> to vector<1x8x128xf32>
    tpu.vector_store %arg12[%c0_43, %c0_44, %c0_45], %63 {strides = array<i32>} : memref<1x8x128xf32, #tpu.memory_space<vmem>>, vector<1x8x128xf32>,
    return
  }
  func.func @transform_0(%arg0: i32, %arg1: i32) -> (i32, i32, i32) {
    %c0_i32 = arith.constant 0 : i32
    %c0_i32_0 = arith.constant 0 : i32
    %c0_i32_1 = arith.constant 0 : i32
    return %arg0, %c0_i32, %c0_i32_0 : i32, i32, i32
  }
  func.func @transform_1(%arg0: i32, %arg1: i32) -> (i32, i32, i32) {
    %c0_i32 = arith.constant 0 : i32
    %c0_i32_0 = arith.constant 0 : i32
    %c0_i32_1 = arith.constant 0 : i32
    return %arg0, %c0_i32, %c0_i32_0 : i32, i32, i32
  }
  func.func @transform_2(%arg0: i32, %arg1: i32) -> (i32, i32, i32) {
    %c0_i32 = arith.constant 0 : i32
    %c0_i32_0 = arith.constant 0 : i32
    %c0_i32_1 = arith.constant 0 : i32
    return %arg0, %c0_i32, %c0_i32_0 : i32, i32, i32
  }
  func.func @transform_3(%arg0: i32, %arg1: i32) -> (i32, i32, i32) {
    %c0_i32 = arith.constant 0 : i32
    %c0_i32_0 = arith.constant 0 : i32
    %c0_i32_1 = arith.constant 0 : i32
    return %arg1, %c0_i32, %c0_i32_0 : i32, i32, i32
  }
  func.func @transform_4(%arg0: i32, %arg1: i32) -> (i32, i32, i32) {
    %c0_i32 = arith.constant 0 : i32
    %c0_i32_0 = arith.constant 0 : i32
    %c0_i32_1 = arith.constant 0 : i32
    return %arg1, %c0_i32, %c0_i32_0 : i32, i32, i32
  }
  func.func @transform_5(%arg0: i32, %arg1: i32) -> (i32, i32, i32) {
    %c0_i32 = arith.constant 0 : i32
    %c0_i32_0 = arith.constant 0 : i32
    %c0_i32_1 = arith.constant 0 : i32
    return %arg1, %c0_i32, %c0_i32_0 : i32, i32, i32
  }
  func.func @transform_6(%arg0: i32, %arg1: i32) -> (i32, i32, i32) {
    %c0_i32 = arith.constant 0 : i32
    %c0_i32_0 = arith.constant 0 : i32
    %c0_i32_1 = arith.constant 0 : i32
    return %arg1, %c0_i32, %c0_i32_0 : i32, i32, i32
  }
  func.func @transform_7(%arg0: i32, %arg1: i32) -> (i32, i32, i32) {
    %c0_i32 = arith.constant 0 : i32
    %c0_i32_0 = arith.constant 0 : i32
    %c0_i32_1 = arith.constant 0 : i32
    return %arg1, %c0_i32, %c0_i32_0 : i32, i32, i32
  }
  func.func @transform_8(%arg0: i32, %arg1: i32) -> (i32, i32, i32) {
    %c0_i32 = arith.constant 0 : i32
    %c0_i32_0 = arith.constant 0 : i32
    %c0_i32_1 = arith.constant 0 : i32
    return %arg1, %c0_i32, %c0_i32_0 : i32, i32, i32
  }
  func.func @transform_9(%arg0: i32, %arg1: i32) -> (i32, i32) {
    %c0_i32 = arith.constant 0 : i32
    %c0_i32_0 = arith.constant 0 : i32
    %c0_i32_1 = arith.constant 0 : i32
    return %c0_i32, %c0_i32_0 : i32, i32
  }
  func.func @transform_10(%arg0: i32, %arg1: i32) -> (i32, i32, i32) {
    %c0_i32 = arith.constant 0 : i32
    %c0_i32_0 = arith.constant 0 : i32
    %c0_i32_1 = arith.constant 0 : i32
    return %arg0, %c0_i32, %c0_i32_0 : i32, i32, i32
  }
}

</mosaic_0001>

<llo_original>
// kernel: tpu_custom_call.1
$region0: #{tpu_custom_call.1}
  #allocation0 [shape = 'u32[]', space=smem, size = 0x4, offset = 0x4, fixed_abs, tag = 'smem constant byte address 0x4 - core index']
  #allocation1 [shape = 'u32[144,128]{1,0:T(1,128)}', space=vmem, size = 0x12000, scoped, tag = 'internal scratch']
  %s0 = inlined_call_operand.vmem [shape: bf16[2,8,16], index: 0, kind: input, shape index: {}]
  %s1 = inlined_call_operand.vmem [shape: bf16[2,8,8], index: 1, kind: input, shape index: {}]
  %s2 = inlined_call_operand.vmem [shape: f32[2,1,8], index: 2, kind: input, shape index: {}]
  %s3 = inlined_call_operand.vmem [shape: bf16[4,16,8], index: 3, kind: input, shape index: {}]
  %s4 = inlined_call_operand.vmem [shape: bf16[4,16,8], index: 4, kind: input, shape index: {}]
  %s5 = inlined_call_operand.vmem [shape: bf16[4,16,8], index: 5, kind: input, shape index: {}]
  %s6 = inlined_call_operand.vmem [shape: bf16[4,8,8], index: 6, kind: input, shape index: {}]
  %s7 = inlined_call_operand.vmem [shape: bf16[4,8,8], index: 7, kind: input, shape index: {}]
  %s8 = inlined_call_operand.vmem [shape: bf16[4,8,128], index: 8, kind: input, shape index: {}]
  %s9 = inlined_call_operand.vmem [shape: f32[1,128], index: 9, kind: input, shape index: {}]
  %s10 = inlined_call_operand.hbm [shape: f32[2,8,128], index: 10, kind: output, shape index: {}]
  %s11 = sld [smem:[#allocation0]]
  $region77: #{tpu_custom_call.1} parent=0
    _
  %s13 = ssub.s32 1, %s11
  %s14 = scalar_select 0, %s13, %s11
  $region1: #{tpu_custom_call.1} parent=0
    #allocation2 [shape = 'u8[8192]{0}', space=vmem, size = 0x2000, scoped, tag = 'output window, operand 0']
    #allocation3 [shape = 's32[2]{0}', space=sflag, size = 0x8, scoped, tag = 'scoped memory for tpu_custom_call.1']
    %15 = vsyncpa [#allocation3], 0
    %s16 = scalar_lea.sflag [#allocation3], 1
    %17 = vsyncpa %s16, 0
    loop: start=0, step=1, limit=10
    $region2: #{tpu_custom_call.1} parent=1 // loop_pre_header
      _
    $region3: #{tpu_custom_call.1} parent=1 // loop_header
      %s19 = sphi 0, %s23
      %p20 = scmp.ge.s32.totalorder %s19, 10
      %s26 = sphi 0, %s38
      %s27 = sphi 0, %s34
      %s28 = sphi 0, %s26
      %s29 = sphi 0, %s27
      %s30 = sphi 0, %s28
      %s31 = sphi 0, %s29
      %s41 = sphi 0, %s43
      %s44 = sphi 0, %s41
      %s45 = sphi 0, %s44
      %s61 = sphi 0, %s45
      %s67 = sphi 0, %s69
      %s70 = sphi 0, %s67
      %s71 = sphi 0, %s70
      %s87 = sphi 0, %s71
      %s93 = sphi 0, %s95
      %s96 = sphi 0, %s93
      %s97 = sphi 0, %s96
      %s113 = sphi 0, %s97
      %s119 = sphi 0, %s121
      %s122 = sphi 0, %s119
      %s123 = sphi 0, %s122
      %s139 = sphi 0, %s123
      %s145 = sphi 0, %s147
      %s148 = sphi 0, %s145
      %s149 = sphi 0, %s148
      %s165 = sphi 0, %s149
      %s171 = sphi 0, %s173
      %s174 = sphi 0, %s171
      %s175 = sphi 0, %s174
      %s191 = sphi 0, %s175
      %s197 = sphi 0, %s199
      %s200 = sphi 0, %s197
      %s201 = sphi 0, %s200
      %s217 = sphi 0, %s201
      %s223 = sphi 0, %s225
      %s226 = sphi 0, %s223
      %s227 = sphi 0, %s226
      %s243 = sphi 0, %s227
      %s249 = sphi 0, %s251
      %s252 = sphi 0, %s249
      %s253 = sphi 0, %s252
      %s269 = sphi 0, %s253
      %s273 = sphi 0, %s273
      %s275 = sphi 0, %s273
      %s276 = sphi 0, %s275
      %s290 = sphi 0, %s276
      %s296 = sphi 0, %s298
      %s299 = sphi 0, %s296
      %s300 = sphi 0, %s299
      %s316 = sphi 0, %s300
    $region4: #{tpu_custom_call.1} parent=1 // loop_header_branch
      %22 = sbr.rel (%p20) target = $region8
    $region5: #{tpu_custom_call.1} parent=1 // loop_body
      %s24 = ssub.s32 %s19, 1
      %s25 = ssub.s32 %s19, 2
      %s32 = sadd.s32 1, %s27
      %p33 = scmp.ge.s32.totalorder %s32, 4
      %s34 = scalar_select %p33, 0, %s32
      %s35 = sadd.s32 1, %s26
      %s36 = scalar_select %p33, %s35, %s26
      %p37 = scmp.ge.s32.totalorder %s36, 2
      %s38 = scalar_select %p37, 0, %s36
      %s39 = ssub.s32 %s26, %s38
      %p40 = scmp.eq.s32.totalorder %s39, 0
      %s42 = sadd.s32 %s41, 1
      %s43 = scalar_select %p40, %s41, %s42
      %p46 = pneg %p40
      %p47 = scmp.eq.s32.totalorder %s19, 7
      %p48 = por %p46, %p47
      %p49 = scmp.ne.s32.totalorder %s41, %s44
      %p50 = scmp.eq.s32.totalorder %s19, 0
      %p51 = por %p49, %p50
      %p52 = scmp.ne.s32.totalorder %s41, %s44
      %p53 = scmp.eq.s32.totalorder %s24, 7
      %p54 = por %p52, %p53
      %p55 = scmp.ne.s32.totalorder %s44, %s45
      %p56 = scmp.eq.s32.totalorder %s24, 0
      %p57 = por %p55, %p56
      %p58 = scmp.ne.s32.totalorder %s44, %s45
      %p59 = scmp.eq.s32.totalorder %s25, 7
      %p60 = por %p58, %p59
      %p62 = scmp.ne.s32.totalorder %s45, %s61
      %p63 = scmp.eq.s32.totalorder %s25, 0
      %p64 = por %p62, %p63
      %s65 = ssub.s32 %s26, %s38
      %p66 = scmp.eq.s32.totalorder %s65, 0
      %s68 = sadd.s32 %s67, 1
      %s69 = scalar_select %p66, %s67, %s68
      %p72 = pneg %p66
      %p73 = scmp.eq.s32.totalorder %s19, 7
      %p74 = por %p72, %p73
      %p75 = scmp.ne.s32.totalorder %s67, %s70
      %p76 = scmp.eq.s32.totalorder %s19, 0
      %p77 = por %p75, %p76
      %p78 = scmp.ne.s32.totalorder %s67, %s70
      %p79 = scmp.eq.s32.totalorder %s24, 7
      %p80 = por %p78, %p79
      %p81 = scmp.ne.s32.totalorder %s70, %s71
      %p82 = scmp.eq.s32.totalorder %s24, 0
      %p83 = por %p81, %p82
      %p84 = scmp.ne.s32.totalorder %s70, %s71
      %p85 = scmp.eq.s32.totalorder %s25, 7
      %p86 = por %p84, %p85
      %p88 = scmp.ne.s32.totalorder %s71, %s87
      %p89 = scmp.eq.s32.totalorder %s25, 0
      %p90 = por %p88, %p89
      %s91 = ssub.s32 %s26, %s38
      %p92 = scmp.eq.s32.totalorder %s91, 0
      %s94 = sadd.s32 %s93, 1
      %s95 = scalar_select %p92, %s93, %s94
      %p98 = pneg %p92
      %p99 = scmp.eq.s32.totalorder %s19, 7
      %p100 = por %p98, %p99
      %p101 = scmp.ne.s32.totalorder %s93, %s96
      %p102 = scmp.eq.s32.totalorder %s19, 0
      %p103 = por %p101, %p102
      %p104 = scmp.ne.s32.totalorder %s93, %s96
      %p105 = scmp.eq.s32.totalorder %s24, 7
      %p106 = por %p104, %p105
      %p107 = scmp.ne.s32.totalorder %s96, %s97
      %p108 = scmp.eq.s32.totalorder %s24, 0
      %p109 = por %p107, %p108
      %p110 = scmp.ne.s32.totalorder %s96, %s97
      %p111 = scmp.eq.s32.totalorder %s25, 7
      %p112 = por %p110, %p111
      %p114 = scmp.ne.s32.totalorder %s97, %s113
      %p115 = scmp.eq.s32.totalorder %s25, 0
      %p116 = por %p114, %p115
      %s117 = ssub.s32 %s27, %s34
      %p118 = scmp.eq.s32.totalorder %s117, 0
      %s120 = sadd.s32 %s119, 1
      %s121 = scalar_select %p118, %s119, %s120
      %p124 = pneg %p118
      %p125 = scmp.eq.s32.totalorder %s19, 7
      %p126 = por %p124, %p125
      %p127 = scmp.ne.s32.totalorder %s119, %s122
      %p128 = scmp.eq.s32.totalorder %s19, 0
      %p129 = por %p127, %p128
      %p130 = scmp.ne.s32.totalorder %s119, %s122
      %p131 = scmp.eq.s32.totalorder %s24, 7
      %p132 = por %p130, %p131
      %p133 = scmp.ne.s32.totalorder %s122, %s123
      %p134 = scmp.eq.s32.totalorder %s24, 0
      %p135 = por %p133, %p134
      %p136 = scmp.ne.s32.totalorder %s122, %s123
      %p137 = scmp.eq.s32.totalorder %s25, 7
      %p138 = por %p136, %p137
      %p140 = scmp.ne.s32.totalorder %s123, %s139
      %p141 = scmp.eq.s32.totalorder %s25, 0
      %p142 = por %p140, %p141
      %s143 = ssub.s32 %s27, %s34
      %p144 = scmp.eq.s32.totalorder %s143, 0
      %s146 = sadd.s32 %s145, 1
      %s147 = scalar_select %p144, %s145, %s146
      %p150 = pneg %p144
      %p151 = scmp.eq.s32.totalorder %s19, 7
      %p152 = por %p150, %p151
      %p153 = scmp.ne.s32.totalorder %s145, %s148
      %p154 = scmp.eq.s32.totalorder %s19, 0
      %p155 = por %p153, %p154
      %p156 = scmp.ne.s32.totalorder %s145, %s148
      %p157 = scmp.eq.s32.totalorder %s24, 7
      %p158 = por %p156, %p157
      %p159 = scmp.ne.s32.totalorder %s148, %s149
      %p160 = scmp.eq.s32.totalorder %s24, 0
      %p161 = por %p159, %p160
      %p162 = scmp.ne.s32.totalorder %s148, %s149
      %p163 = scmp.eq.s32.totalorder %s25, 7
      %p164 = por %p162, %p163
      %p166 = scmp.ne.s32.totalorder %s149, %s165
      %p167 = scmp.eq.s32.totalorder %s25, 0
      %p168 = por %p166, %p167
      %s169 = ssub.s32 %s27, %s34
      %p170 = scmp.eq.s32.totalorder %s169, 0
      %s172 = sadd.s32 %s171, 1
      %s173 = scalar_select %p170, %s171, %s172
      %p176 = pneg %p170
      %p177 = scmp.eq.s32.totalorder %s19, 7
      %p178 = por %p176, %p177
      %p179 = scmp.ne.s32.totalorder %s171, %s174
      %p180 = scmp.eq.s32.totalorder %s19, 0
      %p181 = por %p179, %p180
      %p182 = scmp.ne.s32.totalorder %s171, %s174
      %p183 = scmp.eq.s32.totalorder %s24, 7
      %p184 = por %p182, %p183
      %p185 = scmp.ne.s32.totalorder %s174, %s175
      %p186 = scmp.eq.s32.totalorder %s24, 0
      %p187 = por %p185, %p186
      %p188 = scmp.ne.s32.totalorder %s174, %s175
      %p189 = scmp.eq.s32.totalorder %s25, 7
      %p190 = por %p188, %p189
      %p192 = scmp.ne.s32.totalorder %s175, %s191
      %p193 = scmp.eq.s32.totalorder %s25, 0
      %p194 = por %p192, %p193
      %s195 = ssub.s32 %s27, %s34
      %p196 = scmp.eq.s32.totalorder %s195, 0
      %s198 = sadd.s32 %s197, 1
      %s199 = scalar_select %p196, %s197, %s198
      %p202 = pneg %p196
      %p203 = scmp.eq.s32.totalorder %s19, 7
      %p204 = por %p202, %p203
      %p205 = scmp.ne.s32.totalorder %s197, %s200
      %p206 = scmp.eq.s32.totalorder %s19, 0
      %p207 = por %p205, %p206
      %p208 = scmp.ne.s32.totalorder %s197, %s200
      %p209 = scmp.eq.s32.totalorder %s24, 7
      %p210 = por %p208, %p209
      %p211 = scmp.ne.s32.totalorder %s200, %s201
      %p212 = scmp.eq.s32.totalorder %s24, 0
      %p213 = por %p211, %p212
      %p214 = scmp.ne.s32.totalorder %s200, %s201
      %p215 = scmp.eq.s32.totalorder %s25, 7
      %p216 = por %p214, %p215
      %p218 = scmp.ne.s32.totalorder %s201, %s217
      %p219 = scmp.eq.s32.totalorder %s25, 0
      %p220 = por %p218, %p219
      %s221 = ssub.s32 %s27, %s34
      %p222 = scmp.eq.s32.totalorder %s221, 0
      %s224 = sadd.s32 %s223, 1
      %s225 = scalar_select %p222, %s223, %s224
      %p228 = pneg %p222
      %p229 = scmp.eq.s32.totalorder %s19, 7
      %p230 = por %p228, %p229
      %p231 = scmp.ne.s32.totalorder %s223, %s226
      %p232 = scmp.eq.s32.totalorder %s19, 0
      %p233 = por %p231, %p232
      %p234 = scmp.ne.s32.totalorder %s223, %s226
      %p235 = scmp.eq.s32.totalorder %s24, 7
      %p236 = por %p234, %p235
      %p237 = scmp.ne.s32.totalorder %s226, %s227
      %p238 = scmp.eq.s32.totalorder %s24, 0
      %p239 = por %p237, %p238
      %p240 = scmp.ne.s32.totalorder %s226, %s227
      %p241 = scmp.eq.s32.totalorder %s25, 7
      %p242 = por %p240, %p241
      %p244 = scmp.ne.s32.totalorder %s227, %s243
      %p245 = scmp.eq.s32.totalorder %s25, 0
      %p246 = por %p244, %p245
      %s247 = ssub.s32 %s27, %s34
      %p248 = scmp.eq.s32.totalorder %s247, 0
      %s250 = sadd.s32 %s249, 1
      %s251 = scalar_select %p248, %s249, %s250
      %p254 = pneg %p248
      %p255 = scmp.eq.s32.totalorder %s19, 7
      %p256 = por %p254, %p255
      %p257 = scmp.ne.s32.totalorder %s249, %s252
      %p258 = scmp.eq.s32.totalorder %s19, 0
      %p259 = por %p257, %p258
      %p260 = scmp.ne.s32.totalorder %s249, %s252
      %p261 = scmp.eq.s32.totalorder %s24, 7
      %p262 = por %p260, %p261
      %p263 = scmp.ne.s32.totalorder %s252, %s253
      %p264 = scmp.eq.s32.totalorder %s24, 0
      %p265 = por %p263, %p264
      %p266 = scmp.ne.s32.totalorder %s252, %s253
      %p267 = scmp.eq.s32.totalorder %s25, 7
      %p268 = por %p266, %p267
      %p270 = scmp.ne.s32.totalorder %s253, %s269
      %p271 = scmp.eq.s32.totalorder %s25, 0
      %p272 = por %p270, %p271
      %s274 = sadd.s32 %s273, 1
      %p277 = scmp.eq.s32.totalorder %s19, 7
      %p278 = scmp.ne.s32.totalorder %s273, %s275
      %p279 = scmp.eq.s32.totalorder %s19, 0
      %p280 = por %p278, %p279
      %p281 = scmp.ne.s32.totalorder %s273, %s275
      %p282 = scmp.eq.s32.totalorder %s24, 7
      %p283 = por %p281, %p282
      %p284 = scmp.ne.s32.totalorder %s275, %s276
      %p285 = scmp.eq.s32.totalorder %s24, 0
      %p286 = por %p284, %p285
      %p287 = scmp.ne.s32.totalorder %s275, %s276
      %p288 = scmp.eq.s32.totalorder %s25, 7
      %p289 = por %p287, %p288
      %p291 = scmp.ne.s32.totalorder %s276, %s290
      %p292 = scmp.eq.s32.totalorder %s25, 0
      %p293 = por %p291, %p292
      %s294 = ssub.s32 %s26, %s38
      %p295 = scmp.eq.s32.totalorder %s294, 0
      %s297 = sadd.s32 %s296, 1
      %s298 = scalar_select %p295, %s296, %s297
      %p301 = pneg %p295
      %p302 = scmp.eq.s32.totalorder %s19, 7
      %p303 = por %p301, %p302
      %p304 = scmp.ne.s32.totalorder %s296, %s299
      %p305 = scmp.eq.s32.totalorder %s19, 0
      %p306 = por %p304, %p305
      %p307 = scmp.ne.s32.totalorder %s296, %s299
      %p308 = scmp.eq.s32.totalorder %s24, 7
      %p309 = por %p307, %p308
      %p310 = scmp.ne.s32.totalorder %s299, %s300
      %p311 = scmp.eq.s32.totalorder %s24, 0
      %p312 = por %p310, %p311
      %p313 = scmp.ne.s32.totalorder %s299, %s300
      %p314 = scmp.eq.s32.totalorder %s25, 7
      %p315 = por %p313, %p314
      %p317 = scmp.ne.s32.totalorder %s300, %s316
      %p318 = scmp.eq.s32.totalorder %s25, 0
      %p319 = por %p317, %p318
      %p320 = scmp.le.s32.totalorder 1, %s19
      %p321 = scmp.lt.s32.totalorder %s19, 9
      %p322 = pnand %p320, %p321
      %p323 = pneg %p322
      // Predicated region
      $region9: #{tpu_custom_call.1} parent=5 // pred_check
        _
      $region10: #{tpu_custom_call.1} parent=5 // pred_check_branch
        %325 = sbr.rel (%p322) target = $region12
      $region11: #{tpu_custom_call.1} parent=5 // pred_region
        %s326 = ssub.s32 %s19, 1
        // Predicated region
        $region13: #{tpu_custom_call.1} parent=11 // pred_check
          %p327 = pneg %p286
        $region14: #{tpu_custom_call.1} parent=11 // pred_check_branch
          %329 = sbr.rel (%p327) target = $region16
        $region15: #{tpu_custom_call.1} parent=11 // pred_region
          _
        $region16: #{tpu_custom_call.1} parent=11 // pred_fallthru
          _
      $region12: #{tpu_custom_call.1} parent=5 // pred_fallthru
        _
      %p330 = scmp.lt.s32.totalorder %s19, 8
      // Predicated region
      $region17: #{tpu_custom_call.1} parent=5 // pred_check
        %p331 = pneg %p330
      $region18: #{tpu_custom_call.1} parent=5 // pred_check_branch
        %333 = sbr.rel (%p331) target = $region20
      $region19: #{tpu_custom_call.1} parent=5 // pred_region
        // Predicated region
        $region21: #{tpu_custom_call.1} parent=19 // pred_check
          %p334 = pneg %p51
        $region22: #{tpu_custom_call.1} parent=19 // pred_check_branch
          %336 = sbr.rel (%p334) target = $region24
        $region23: #{tpu_custom_call.1} parent=19 // pred_region
          %p337 = scmp.lt.s32.totalorder %s26, 1
          %s338 = scalar_select %p337, %s26, 1
          %s339 = smul.addr %s338, 4
          %s340 = scalar_lea.vmem %s0, %s339
        $region24: #{tpu_custom_call.1} parent=19 // pred_fallthru
          _
        // Predicated region
        $region25: #{tpu_custom_call.1} parent=19 // pred_check
          %p341 = pneg %p77
        $region26: #{tpu_custom_call.1} parent=19 // pred_check_branch
          %343 = sbr.rel (%p341) target = $region28
        $region27: #{tpu_custom_call.1} parent=19 // pred_region
          %p344 = scmp.lt.s32.totalorder %s26, 1
          %s345 = scalar_select %p344, %s26, 1
          %s346 = smul.addr %s345, 4
          %s347 = scalar_lea.vmem %s1, %s346
        $region28: #{tpu_custom_call.1} parent=19 // pred_fallthru
          _
        // Predicated region
        $region29: #{tpu_custom_call.1} parent=19 // pred_check
          %p348 = pneg %p103
        $region30: #{tpu_custom_call.1} parent=19 // pred_check_branch
          %350 = sbr.rel (%p348) target = $region32
        $region31: #{tpu_custom_call.1} parent=19 // pred_region
          %p351 = scmp.lt.s32.totalorder %s26, 1
          %s352 = scalar_select %p351, %s26, 1
          %s353 = scalar_lea.vmem %s2, %s352
        $region32: #{tpu_custom_call.1} parent=19 // pred_fallthru
          _
        // Predicated region
        $region33: #{tpu_custom_call.1} parent=19 // pred_check
          %p354 = pneg %p129
        $region34: #{tpu_custom_call.1} parent=19 // pred_check_branch
          %356 = sbr.rel (%p354) target = $region36
        $region35: #{tpu_custom_call.1} parent=19 // pred_region
          %p357 = scmp.lt.s32.totalorder %s27, 3
          %s358 = scalar_select %p357, %s27, 3
          %s359 = smul.addr %s358, 2
          %s360 = smul.addr %s359, 4
          %s361 = scalar_lea.vmem %s3, %s360
        $region36: #{tpu_custom_call.1} parent=19 // pred_fallthru
          _
        // Predicated region
        $region37: #{tpu_custom_call.1} parent=19 // pred_check
          %p362 = pneg %p155
        $region38: #{tpu_custom_call.1} parent=19 // pred_check_branch
          %364 = sbr.rel (%p362) target = $region40
        $region39: #{tpu_custom_call.1} parent=19 // pred_region
          %p365 = scmp.lt.s32.totalorder %s27, 3
          %s366 = scalar_select %p365, %s27, 3
          %s367 = smul.addr %s366, 2
          %s368 = smul.addr %s367, 4
          %s369 = scalar_lea.vmem %s4, %s368
        $region40: #{tpu_custom_call.1} parent=19 // pred_fallthru
          _
        // Predicated region
        $region41: #{tpu_custom_call.1} parent=19 // pred_check
          %p370 = pneg %p181
        $region42: #{tpu_custom_call.1} parent=19 // pred_check_branch
          %372 = sbr.rel (%p370) target = $region44
        $region43: #{tpu_custom_call.1} parent=19 // pred_region
          %p373 = scmp.lt.s32.totalorder %s27, 3
          %s374 = scalar_select %p373, %s27, 3
          %s375 = smul.addr %s374, 2
          %s376 = smul.addr %s375, 4
          %s377 = scalar_lea.vmem %s5, %s376
        $region44: #{tpu_custom_call.1} parent=19 // pred_fallthru
          _
        // Predicated region
        $region45: #{tpu_custom_call.1} parent=19 // pred_check
          %p378 = pneg %p207
        $region46: #{tpu_custom_call.1} parent=19 // pred_check_branch
          %380 = sbr.rel (%p378) target = $region48
        $region47: #{tpu_custom_call.1} parent=19 // pred_region
          %p381 = scmp.lt.s32.totalorder %s27, 3
          %s382 = scalar_select %p381, %s27, 3
          %s383 = smul.addr %s382, 4
          %s384 = scalar_lea.vmem %s6, %s383
        $region48: #{tpu_custom_call.1} parent=19 // pred_fallthru
          _
        // Predicated region
        $region49: #{tpu_custom_call.1} parent=19 // pred_check
          %p385 = pneg %p233
        $region50: #{tpu_custom_call.1} parent=19 // pred_check_branch
          %387 = sbr.rel (%p385) target = $region52
        $region51: #{tpu_custom_call.1} parent=19 // pred_region
          %p388 = scmp.lt.s32.totalorder %s27, 3
          %s389 = scalar_select %p388, %s27, 3
          %s390 = smul.addr %s389, 4
          %s391 = scalar_lea.vmem %s7, %s390
        $region52: #{tpu_custom_call.1} parent=19 // pred_fallthru
          _
        // Predicated region
        $region53: #{tpu_custom_call.1} parent=19 // pred_check
          %p392 = pneg %p259
        $region54: #{tpu_custom_call.1} parent=19 // pred_check_branch
          %394 = sbr.rel (%p392) target = $region56
        $region55: #{tpu_custom_call.1} parent=19 // pred_region
          %p395 = scmp.lt.s32.totalorder %s27, 3
          %s396 = scalar_select %p395, %s27, 3
          %s397 = smul.addr %s396, 4
          %s398 = scalar_lea.vmem %s8, %s397
        $region56: #{tpu_custom_call.1} parent=19 // pred_fallthru
          _
      $region20: #{tpu_custom_call.1} parent=5 // pred_fallthru
        _
      %p399 = scmp.le.s32.totalorder 1, %s19
      %p400 = scmp.lt.s32.totalorder %s19, 9
      %p401 = pnand %p399, %p400
      %p402 = pneg %p401
      // Predicated region
      $region57: #{tpu_custom_call.1} parent=5 // pred_check
        _
      $region58: #{tpu_custom_call.1} parent=5 // pred_check_branch
        %404 = sbr.rel (%p401) target = $region60
      $region59: #{tpu_custom_call.1} parent=5 // pred_region
        %s405 = ssub.s32 %s19, 1
        %p406 = scmp.lt.s32.totalorder %s28, 1
        %s407 = scalar_select %p406, %s28, 1
        %s408 = smul.addr %s407, 4
        %s409 = scalar_lea.vmem %s0, %s408
        %p410 = pneg %p57
        %p411 = pneg %p54
        %p412 = scmp.lt.s32.totalorder %s28, 1
        %s413 = scalar_select %p412, %s28, 1
        %s414 = smul.addr %s413, 4
        %s415 = scalar_lea.vmem %s1, %s414
        %p416 = pneg %p83
        %p417 = pneg %p80
        %p418 = scmp.lt.s32.totalorder %s28, 1
        %s419 = scalar_select %p418, %s28, 1
        %s420 = scalar_lea.vmem %s2, %s419
        %p421 = pneg %p109
        %p422 = pneg %p106
        %p423 = scmp.lt.s32.totalorder %s29, 3
        %s424 = scalar_select %p423, %s29, 3
        %s425 = smul.addr %s424, 2
        %s426 = smul.addr %s425, 4
        %s427 = scalar_lea.vmem %s3, %s426
        %p428 = pneg %p135
        %p429 = pneg %p132
        %p430 = scmp.lt.s32.totalorder %s29, 3
        %s431 = scalar_select %p430, %s29, 3
        %s432 = smul.addr %s431, 2
        %s433 = smul.addr %s432, 4
        %s434 = scalar_lea.vmem %s4, %s433
        %p435 = pneg %p161
        %p436 = pneg %p158
        %p437 = scmp.lt.s32.totalorder %s29, 3
        %s438 = scalar_select %p437, %s29, 3
        %s439 = smul.addr %s438, 2
        %s440 = smul.addr %s439, 4
        %s441 = scalar_lea.vmem %s5, %s440
        %p442 = pneg %p187
        %p443 = pneg %p184
        %p444 = scmp.lt.s32.totalorder %s29, 3
        %s445 = scalar_select %p444, %s29, 3
        %s446 = smul.addr %s445, 4
        %s447 = scalar_lea.vmem %s6, %s446
        %p448 = pneg %p213
        %p449 = pneg %p210
        %p450 = scmp.lt.s32.totalorder %s29, 3
        %s451 = scalar_select %p450, %s29, 3
        %s452 = smul.addr %s451, 4
        %s453 = scalar_lea.vmem %s7, %s452
        %p454 = pneg %p239
        %p455 = pneg %p236
        %p456 = scmp.lt.s32.totalorder %s29, 3
        %s457 = scalar_select %p456, %s29, 3
        %s458 = smul.addr %s457, 4
        %s459 = scalar_lea.vmem %s8, %s458
        %p460 = pneg %p265
        %p461 = pneg %p262
        %p462 = pneg %p286
        %p463 = pneg %p283
        %p464 = pneg %p312
        %p465 = pneg %p309
        %s466 = sand.u32 %s299, 1
        %s467 = scalar_lea.sflag [#allocation3], %s466
        %s468 = sand.u32 %s299, 1
        %s469 = smul.addr %s468, 8
        %s470 = scalar_lea.vmem [#allocation2], %s469
        %p471 = scmp.lt.s32.totalorder %s28, 1
        %s472 = scalar_select %p471, %s28, 1
        %s473 = smul.addr %s472, 4
        %s474 = scalar_lea.vmem %s0, %s473
        %p475 = scmp.lt.s32.totalorder %s28, 1
        %s476 = scalar_select %p475, %s28, 1
        %s477 = smul.addr %s476, 4
        %s478 = scalar_lea.vmem %s1, %s477
        %p479 = scmp.lt.s32.totalorder %s28, 1
        %s480 = scalar_select %p479, %s28, 1
        %s481 = scalar_lea.vmem %s2, %s480
        %p482 = scmp.lt.s32.totalorder %s29, 3
        %s483 = scalar_select %p482, %s29, 3
        %s484 = smul.addr %s483, 2
        %s485 = smul.addr %s484, 4
        %s486 = scalar_lea.vmem %s3, %s485
        %p487 = scmp.lt.s32.totalorder %s29, 3
        %s488 = scalar_select %p487, %s29, 3
        %s489 = smul.addr %s488, 2
        %s490 = smul.addr %s489, 4
        %s491 = scalar_lea.vmem %s4, %s490
        %p492 = scmp.lt.s32.totalorder %s29, 3
        %s493 = scalar_select %p492, %s29, 3
        %s494 = smul.addr %s493, 2
        %s495 = smul.addr %s494, 4
        %s496 = scalar_lea.vmem %s5, %s495
        %p497 = scmp.lt.s32.totalorder %s29, 3
        %s498 = scalar_select %p497, %s29, 3
        %s499 = smul.addr %s498, 4
        %s500 = scalar_lea.vmem %s6, %s499
        %p501 = scmp.lt.s32.totalorder %s29, 3
        %s502 = scalar_select %p501, %s29, 3
        %s503 = smul.addr %s502, 4
        %s504 = scalar_lea.vmem %s7, %s503
        %p505 = scmp.lt.s32.totalorder %s29, 3
        %s506 = scalar_select %p505, %s29, 3
        %s507 = smul.addr %s506, 4
        %s508 = scalar_lea.vmem %s8, %s507
        %p510 = scmp.eq.s32.totalorder %s29, 0
        // Predicated region
        $region61: #{tpu_custom_call.1} parent=59 // pred_check
          %p511 = pneg %p510
        $region62: #{tpu_custom_call.1} parent=59 // pred_check_branch
          %513 = sbr.rel (%p511) target = $region64
        $region63: #{tpu_custom_call.1} parent=59 // pred_region
          %v514 = vld [vmem:[%s9] sm:$0x1]
          %v516 = vlaneseq
          %v517 = vshrl.u32 %v516, 7
          %v518 = vsub.s32 0, %v517
          %v519 = vrot.slane %v514, %v518
          %521 = vst [vmem:[%s470] sm:$0xff] %v519
        $region64: #{tpu_custom_call.1} parent=59 // pred_fallthru
          _
        %v522 = vld [vmem:[%s474] sm:$0xf]
        %v523 = vld [vmem:[%s478] sm:$0xf]
        %v524 = vld [vmem:[%s486] sm:$0xf]
        %v525 = vld [vmem:[%s486 + $0x4] sm:$0xf]
        %v528 = vunpack.c.l.b16 %v524
        %v529 = vunpack.c.l.b16 %v525
        %v530 = vpack.c.b16 %v529, %v528
        %vm532 = vcmask 130048
        %v534 = vsel %vm532, %v522, 0
        %536 = vmatprep.subr.bf16.mxu0 0
        %537 = vmatpush1.bf16.msra.mxu0 0
        %538 = vmatprep.subr.bf16.mxu0 0
        %539 = vmatpush1.bf16.msra.mxu0 0
        %540 = vmatprep.subr.bf16.mxu0 0
        %541 = vmatpush1.bf16.msra.mxu0 0
        %542 = vmatprep.subr.bf16.mxu0 0
        %543 = vmatpush1.bf16.msra.mxu0 0
        %544 = vmatprep.subr.bf16.mxu0 0
        %545 = vmatpush1.bf16.msra.mxu0 0
        %546 = vmatprep.subr.bf16.mxu0 0
        %547 = vmatpush1.bf16.msra.mxu0 0
        %548 = vmatprep.subr.bf16.mxu0 0
        %549 = vmatpush1.bf16.msra.mxu0 0
        %550 = vmatprep.subr.bf16.mxu0 0
        %551 = vmatpush1.bf16.msra.mxu0 %v530
        %552 = vmatprep.subr.bf16.mxu0 0
        %553 = vmatpush2.bf16.msra.mxu0 0
        %554 = vmatprep.subr.bf16.mxu0 0
        %555 = vmatpush2.bf16.msra.mxu0 0
        %556 = vmatprep.subr.bf16.mxu0 0
        %557 = vmatpush2.bf16.msra.mxu0 0
        %558 = vmatprep.subr.bf16.mxu0 0
        %559 = vmatpush2.bf16.msra.mxu0 0
        %560 = vmatprep.subr.bf16.mxu0 0
        %561 = vmatpush2.bf16.msra.mxu0 0
        %562 = vmatprep.subr.bf16.mxu0 0
        %563 = vmatpush2.bf16.msra.mxu0 0
        %564 = vmatprep.subr.bf16.mxu0 0
        %565 = vmatpush2.bf16.msra.mxu0 0
        %566 = vmatprep.subr.bf16.mxu0 0
        %567 = vmatpush2.bf16.msra.mxu0 0
        %568 = vmatprep.mubr.bf16.mxu0 0
        %569 = vmatmul.mubr.bf16.gmra.mxu0 %v534
        %v570 = vpop.f32.mrf.mxu0
        %v571 = vadd.f32 0.0, %v570
        %v572 = vpop.f32.mrf.mxu0
        %v573 = vpop.f32.mrf.mxu0
        %v574 = vpop.f32.mrf.mxu0
        %575 = vdwg.mxu0
        %v576 = vld [vmem:[%s491] sm:$0xf]
        %v577 = vld [vmem:[%s491 + $0x4] sm:$0xf]
        %v580 = vunpack.c.l.b16 %v576
        %v581 = vunpack.c.l.b16 %v577
        %v582 = vpack.c.b16 %v581, %v580
        %584 = vmatprep.subr.bf16.mxu0 0
        %585 = vmatpush1.bf16.msra.mxu0 0
        %586 = vmatprep.subr.bf16.mxu0 0
        %587 = vmatpush1.bf16.msra.mxu0 0
        %588 = vmatprep.subr.bf16.mxu0 0
        %589 = vmatpush1.bf16.msra.mxu0 0
        %590 = vmatprep.subr.bf16.mxu0 0
        %591 = vmatpush1.bf16.msra.mxu0 0
        %592 = vmatprep.subr.bf16.mxu0 0
        %593 = vmatpush1.bf16.msra.mxu0 0
        %594 = vmatprep.subr.bf16.mxu0 0
        %595 = vmatpush1.bf16.msra.mxu0 0
        %596 = vmatprep.subr.bf16.mxu0 0
        %597 = vmatpush1.bf16.msra.mxu0 0
        %598 = vmatprep.subr.bf16.mxu0 0
        %599 = vmatpush1.bf16.msra.mxu0 %v582
        %600 = vmatprep.subr.bf16.mxu0 0
        %601 = vmatpush2.bf16.msra.mxu0 0
        %602 = vmatprep.subr.bf16.mxu0 0
        %603 = vmatpush2.bf16.msra.mxu0 0
        %604 = vmatprep.subr.bf16.mxu0 0
        %605 = vmatpush2.bf16.msra.mxu0 0
        %606 = vmatprep.subr.bf16.mxu0 0
        %607 = vmatpush2.bf16.msra.mxu0 0
        %608 = vmatprep.subr.bf16.mxu0 0
        %609 = vmatpush2.bf16.msra.mxu0 0
        %610 = vmatprep.subr.bf16.mxu0 0
        %611 = vmatpush2.bf16.msra.mxu0 0
        %612 = vmatprep.subr.bf16.mxu0 0
        %613 = vmatpush2.bf16.msra.mxu0 0
        %614 = vmatprep.subr.bf16.mxu0 0
        %615 = vmatpush2.bf16.msra.mxu0 0
        %616 = vmatprep.mubr.bf16.mxu0 0
        %617 = vmatmul.mubr.bf16.gmra.mxu0 %v534
        %v618 = vpop.f32.mrf.mxu0
        %v619 = vadd.f32 0.0, %v618
        %v620 = vpop.f32.mrf.mxu0
        %v621 = vpop.f32.mrf.mxu0
        %v622 = vpop.f32.mrf.mxu0
        %623 = vdwg.mxu0
        %v624 = vld [vmem:[%s496] sm:$0xf]
        %v625 = vld [vmem:[%s496 + $0x4] sm:$0xf]
        %v628 = vunpack.c.l.b16 %v624
        %v629 = vunpack.c.l.b16 %v625
        %v630 = vpack.c.b16 %v629, %v628
        %632 = vmatprep.subr.bf16.mxu0 0
        %633 = vmatpush1.bf16.msra.mxu0 0
        %634 = vmatprep.subr.bf16.mxu0 0
        %635 = vmatpush1.bf16.msra.mxu0 0
        %636 = vmatprep.subr.bf16.mxu0 0
        %637 = vmatpush1.bf16.msra.mxu0 0
        %638 = vmatprep.subr.bf16.mxu0 0
        %639 = vmatpush1.bf16.msra.mxu0 0
        %640 = vmatprep.subr.bf16.mxu0 0
        %641 = vmatpush1.bf16.msra.mxu0 0
        %642 = vmatprep.subr.bf16.mxu0 0
        %643 = vmatpush1.bf16.msra.mxu0 0
        %644 = vmatprep.subr.bf16.mxu0 0
        %645 = vmatpush1.bf16.msra.mxu0 0
        %646 = vmatprep.subr.bf16.mxu0 0
        %647 = vmatpush1.bf16.msra.mxu0 %v630
        %648 = vmatprep.subr.bf16.mxu0 0
        %649 = vmatpush2.bf16.msra.mxu0 0
        %650 = vmatprep.subr.bf16.mxu0 0
        %651 = vmatpush2.bf16.msra.mxu0 0
        %652 = vmatprep.subr.bf16.mxu0 0
        %653 = vmatpush2.bf16.msra.mxu0 0
        %654 = vmatprep.subr.bf16.mxu0 0
        %655 = vmatpush2.bf16.msra.mxu0 0
        %656 = vmatprep.subr.bf16.mxu0 0
        %657 = vmatpush2.bf16.msra.mxu0 0
        %658 = vmatprep.subr.bf16.mxu0 0
        %659 = vmatpush2.bf16.msra.mxu0 0
        %660 = vmatprep.subr.bf16.mxu0 0
        %661 = vmatpush2.bf16.msra.mxu0 0
        %662 = vmatprep.subr.bf16.mxu0 0
        %663 = vmatpush2.bf16.msra.mxu0 0
        %664 = vmatprep.mubr.bf16.mxu0 0
        %665 = vmatmul.mubr.bf16.gmra.mxu0 %v534
        %v666 = vpop.f32.mrf.mxu0
        %v667 = vadd.f32 0.0, %v666
        %v668 = vpop.f32.mrf.mxu0
        %v669 = vpop.f32.mrf.mxu0
        %v670 = vpop.f32.mrf.mxu0
        %671 = vdwg.mxu0
        %v672 = vld [vmem:[%s500] sm:$0xf]
        %vm673 = vcmask 64512
        %v675 = vsel %vm673, %v523, 0
        %vm677 = vcmask 1043456
        %v679 = vsel %vm677, %v672, 0
        %681 = vmatprep.subr.bf16.mxu0 0
        %682 = vmatpush1.bf16.msra.mxu0 0
        %683 = vmatprep.subr.bf16.mxu0 0
        %684 = vmatpush1.bf16.msra.mxu0 0
        %685 = vmatprep.subr.bf16.mxu0 0
        %686 = vmatpush1.bf16.msra.mxu0 0
        %687 = vmatprep.subr.bf16.mxu0 0
        %688 = vmatpush1.bf16.msra.mxu0 0
        %689 = vmatprep.subr.bf16.mxu0 0
        %690 = vmatpush1.bf16.msra.mxu0 0
        %691 = vmatprep.subr.bf16.mxu0 0
        %692 = vmatpush1.bf16.msra.mxu0 0
        %693 = vmatprep.subr.bf16.mxu0 0
        %694 = vmatpush1.bf16.msra.mxu0 0
        %695 = vmatprep.subr.bf16.mxu0 0
        %696 = vmatpush1.bf16.msra.mxu0 %v679
        %697 = vmatprep.subr.bf16.mxu0 0
        %698 = vmatpush2.bf16.msra.mxu0 0
        %699 = vmatprep.subr.bf16.mxu0 0
        %700 = vmatpush2.bf16.msra.mxu0 0
        %701 = vmatprep.subr.bf16.mxu0 0
        %702 = vmatpush2.bf16.msra.mxu0 0
        %703 = vmatprep.subr.bf16.mxu0 0
        %704 = vmatpush2.bf16.msra.mxu0 0
        %705 = vmatprep.subr.bf16.mxu0 0
        %706 = vmatpush2.bf16.msra.mxu0 0
        %707 = vmatprep.subr.bf16.mxu0 0
        %708 = vmatpush2.bf16.msra.mxu0 0
        %709 = vmatprep.subr.bf16.mxu0 0
        %710 = vmatpush2.bf16.msra.mxu0 0
        %711 = vmatprep.subr.bf16.mxu0 0
        %712 = vmatpush2.bf16.msra.mxu0 0
        %713 = vmatprep.mubr.bf16.mxu0 0
        %714 = vmatmul.mubr.bf16.gmra.mxu0 %v675
        %v715 = vpop.f32.mrf.mxu0
        %v716 = vadd.f32 0.0, %v715
        %v717 = vpop.f32.mrf.mxu0
        %v718 = vpop.f32.mrf.mxu0
        %v719 = vpop.f32.mrf.mxu0
        %720 = vdwg.mxu0
        %v721 = vld [vmem:[%s504] sm:$0xf]
        %v723 = vsel %vm677, %v721, 0
        %725 = vmatprep.subr.bf16.mxu0 0
        %726 = vmatpush1.bf16.msra.mxu0 0
        %727 = vmatprep.subr.bf16.mxu0 0
        %728 = vmatpush1.bf16.msra.mxu0 0
        %729 = vmatprep.subr.bf16.mxu0 0
        %730 = vmatpush1.bf16.msra.mxu0 0
        %731 = vmatprep.subr.bf16.mxu0 0
        %732 = vmatpush1.bf16.msra.mxu0 0
        %733 = vmatprep.subr.bf16.mxu0 0
        %734 = vmatpush1.bf16.msra.mxu0 0
        %735 = vmatprep.subr.bf16.mxu0 0
        %736 = vmatpush1.bf16.msra.mxu0 0
        %737 = vmatprep.subr.bf16.mxu0 0
        %738 = vmatpush1.bf16.msra.mxu0 0
        %739 = vmatprep.subr.bf16.mxu0 0
        %740 = vmatpush1.bf16.msra.mxu0 %v723
        %741 = vmatprep.subr.bf16.mxu0 0
        %742 = vmatpush2.bf16.msra.mxu0 0
        %743 = vmatprep.subr.bf16.mxu0 0
        %744 = vmatpush2.bf16.msra.mxu0 0
        %745 = vmatprep.subr.bf16.mxu0 0
        %746 = vmatpush2.bf16.msra.mxu0 0
        %747 = vmatprep.subr.bf16.mxu0 0
        %748 = vmatpush2.bf16.msra.mxu0 0
        %749 = vmatprep.subr.bf16.mxu0 0
        %750 = vmatpush2.bf16.msra.mxu0 0
        %751 = vmatprep.subr.bf16.mxu0 0
        %752 = vmatpush2.bf16.msra.mxu0 0
        %753 = vmatprep.subr.bf16.mxu0 0
        %754 = vmatpush2.bf16.msra.mxu0 0
        %755 = vmatprep.subr.bf16.mxu0 0
        %756 = vmatpush2.bf16.msra.mxu0 0
        %757 = vmatprep.mubr.bf16.mxu0 0
        %758 = vmatmul.mubr.bf16.gmra.mxu0 %v675
        %v759 = vpop.f32.mrf.mxu0
        %v760 = vadd.f32 0.0, %v759
        %v761 = vpop.f32.mrf.mxu0
        %v762 = vpop.f32.mrf.mxu0
        %v763 = vpop.f32.mrf.mxu0
        %764 = vdwg.mxu0
        %v765 = vpack.c.bf16 %v571, %v571
        %v766 = vpack.c.bf16 %v619, %v619
        %v767 = vpack.c.bf16 %v716, %v716
        %v768 = vpack.c.bf16 %v760, %v760
        %v770 = vsel %vm673, %v767, 0
        %v773 = vsel %vm673, %v768, 0
        %775 = vmatprep.subr.bf16.mxu0 0
        %776 = vmatpush1.bf16.xpose.msra.mxu0 0
        %777 = vmatprep.subr.bf16.mxu0 0
        %778 = vmatpush1.bf16.xpose.msra.mxu0 0
        %779 = vmatprep.subr.bf16.mxu0 0
        %780 = vmatpush1.bf16.xpose.msra.mxu0 0
        %781 = vmatprep.subr.bf16.mxu0 0
        %782 = vmatpush1.bf16.xpose.msra.mxu0 0
        %783 = vmatprep.subr.bf16.mxu0 0
        %784 = vmatpush1.bf16.xpose.msra.mxu0 0
        %785 = vmatprep.subr.bf16.mxu0 0
        %786 = vmatpush1.bf16.xpose.msra.mxu0 0
        %787 = vmatprep.subr.bf16.mxu0 0
        %788 = vmatpush1.bf16.xpose.msra.mxu0 0
        %789 = vmatprep.subr.bf16.mxu0 0
        %790 = vmatpush1.bf16.xpose.msra.mxu0 %v773
        %791 = vmatprep.subr.bf16.mxu0 0
        %792 = vmatpush2.bf16.xpose.msra.mxu0 0
        %793 = vmatprep.subr.bf16.mxu0 0
        %794 = vmatpush2.bf16.xpose.msra.mxu0 0
        %795 = vmatprep.subr.bf16.mxu0 0
        %796 = vmatpush2.bf16.xpose.msra.mxu0 0
        %797 = vmatprep.subr.bf16.mxu0 0
        %798 = vmatpush2.bf16.xpose.msra.mxu0 0
        %799 = vmatprep.subr.bf16.mxu0 0
        %800 = vmatpush2.bf16.xpose.msra.mxu0 0
        %801 = vmatprep.subr.bf16.mxu0 0
        %802 = vmatpush2.bf16.xpose.msra.mxu0 0
        %803 = vmatprep.subr.bf16.mxu0 0
        %804 = vmatpush2.bf16.xpose.msra.mxu0 0
        %805 = vmatprep.subr.bf16.mxu0 0
        %806 = vmatpush2.bf16.xpose.msra.mxu0 0
        %807 = vmatprep.mubr.bf16.mxu0 0
        %808 = vmatmul.mubr.bf16.gmra.mxu0 %v770
        %v809 = vpop.f32.mrf.mxu0
        %v810 = vadd.f32 0.0, %v809
        %v811 = vpop.f32.mrf.mxu0
        %v812 = vpop.f32.mrf.mxu0
        %v813 = vpop.f32.mrf.mxu0
        %814 = vdwg.mxu0
        %v816 = vsel %vm673, %v765, 0
        %v819 = vsel %vm673, %v766, 0
        %821 = vmatprep.subr.bf16.mxu0 0
        %822 = vmatpush1.bf16.xpose.msra.mxu0 0
        %823 = vmatprep.subr.bf16.mxu0 0
        %824 = vmatpush1.bf16.xpose.msra.mxu0 0
        %825 = vmatprep.subr.bf16.mxu0 0
        %826 = vmatpush1.bf16.xpose.msra.mxu0 0
        %827 = vmatprep.subr.bf16.mxu0 0
        %828 = vmatpush1.bf16.xpose.msra.mxu0 0
        %829 = vmatprep.subr.bf16.mxu0 0
        %830 = vmatpush1.bf16.xpose.msra.mxu0 0
        %831 = vmatprep.subr.bf16.mxu0 0
        %832 = vmatpush1.bf16.xpose.msra.mxu0 0
        %833 = vmatprep.subr.bf16.mxu0 0
        %834 = vmatpush1.bf16.xpose.msra.mxu0 0
        %835 = vmatprep.subr.bf16.mxu0 0
        %836 = vmatpush1.bf16.xpose.msra.mxu0 %v819
        %837 = vmatprep.subr.bf16.mxu0 0
        %838 = vmatpush2.bf16.xpose.msra.mxu0 0
        %839 = vmatprep.subr.bf16.mxu0 0
        %840 = vmatpush2.bf16.xpose.msra.mxu0 0
        %841 = vmatprep.subr.bf16.mxu0 0
        %842 = vmatpush2.bf16.xpose.msra.mxu0 0
        %843 = vmatprep.subr.bf16.mxu0 0
        %844 = vmatpush2.bf16.xpose.msra.mxu0 0
        %845 = vmatprep.subr.bf16.mxu0 0
        %846 = vmatpush2.bf16.xpose.msra.mxu0 0
        %847 = vmatprep.subr.bf16.mxu0 0
        %848 = vmatpush2.bf16.xpose.msra.mxu0 0
        %849 = vmatprep.subr.bf16.mxu0 0
        %850 = vmatpush2.bf16.xpose.msra.mxu0 0
        %851 = vmatprep.subr.bf16.mxu0 0
        %852 = vmatpush2.bf16.xpose.msra.mxu0 0
        %853 = vmatprep.mubr.bf16.mxu0 0
        %854 = vmatmul.mubr.bf16.gmra.mxu0 %v816
        %v855 = vpop.f32.mrf.mxu0
        %v856 = vadd.f32 %v810, %v855
        %v857 = vpop.f32.mrf.mxu0
        %v858 = vpop.f32.mrf.mxu0
        %v859 = vpop.f32.mrf.mxu0
        %860 = vdwg.mxu0
        %v861 = vld [vmem:[%s481] sm:$0x1]
        %v862 = vsub.f32 %v861, 1.0
        %v863 = vmul.f32 %v862, 1e+30
        %v865 = vlaneseq
        %v866 = vshrl.u32 %v865, 7
        %v867 = vsub.s32 0, %v866
        %v868 = vrot.slane %v863, %v867
        %v870 = vadd.f32 %v856, %v868
        %v871 = vsel %vm673, %v870, -inf
        %872 = vmax.xlane.f32.xlu0 %v871
        %v873 = vpop.xlane.xlu0 %872
        %v874 = vsub.f32 %v870, %v873
        %v875 = vmul.f32 %v874, 1.442695
        %v876 = vpow.pop %v875
        %v877 = vsel %vm673, %v876, 0.0
        %878 = vadd.xlane.f32.xlu0 %v877
        %v879 = vpop.xlane.xlu0 %878
        %v880 = vrcp.pop %v879
        %v881 = vmul.f32 %v879, %v880
        %v882 = vsub.f32 2.0, %v881
        %v883 = vmul.f32 %v880, %v882
        %v884 = vpack.c.bf16 %v876, %v876
        %v885 = vpack.c.bf16 %v667, %v667
        %v887 = vsel %vm673, %v884, 0
        %v890 = vsel %vm677, %v885, 0
        %892 = vmatprep.subr.bf16.mxu0 0
        %893 = vmatpush1.bf16.msra.mxu0 0
        %894 = vmatprep.subr.bf16.mxu0 0
        %895 = vmatpush1.bf16.msra.mxu0 0
        %896 = vmatprep.subr.bf16.mxu0 0
        %897 = vmatpush1.bf16.msra.mxu0 0
        %898 = vmatprep.subr.bf16.mxu0 0
        %899 = vmatpush1.bf16.msra.mxu0 0
        %900 = vmatprep.subr.bf16.mxu0 0
        %901 = vmatpush1.bf16.msra.mxu0 0
        %902 = vmatprep.subr.bf16.mxu0 0
        %903 = vmatpush1.bf16.msra.mxu0 0
        %904 = vmatprep.subr.bf16.mxu0 0
        %905 = vmatpush1.bf16.msra.mxu0 0
        %906 = vmatprep.subr.bf16.mxu0 0
        %907 = vmatpush1.bf16.msra.mxu0 %v890
        %908 = vmatprep.subr.bf16.mxu0 0
        %909 = vmatpush2.bf16.msra.mxu0 0
        %910 = vmatprep.subr.bf16.mxu0 0
        %911 = vmatpush2.bf16.msra.mxu0 0
        %912 = vmatprep.subr.bf16.mxu0 0
        %913 = vmatpush2.bf16.msra.mxu0 0
        %914 = vmatprep.subr.bf16.mxu0 0
        %915 = vmatpush2.bf16.msra.mxu0 0
        %916 = vmatprep.subr.bf16.mxu0 0
        %917 = vmatpush2.bf16.msra.mxu0 0
        %918 = vmatprep.subr.bf16.mxu0 0
        %919 = vmatpush2.bf16.msra.mxu0 0
        %920 = vmatprep.subr.bf16.mxu0 0
        %921 = vmatpush2.bf16.msra.mxu0 0
        %922 = vmatprep.subr.bf16.mxu0 0
        %923 = vmatpush2.bf16.msra.mxu0 0
        %924 = vmatprep.mubr.bf16.mxu0 0
        %925 = vmatmul.mubr.bf16.gmra.mxu0 %v887
        %v926 = vpop.f32.mrf.mxu0
        %v927 = vadd.f32 0.0, %v926
        %v928 = vpop.f32.mrf.mxu0
        %v929 = vpop.f32.mrf.mxu0
        %v930 = vpop.f32.mrf.mxu0
        %931 = vdwg.mxu0
        %v932 = vmul.f32 %v927, %v883
        %v933 = vld [vmem:[%s470] sm:$0xff]
        %v934 = vpack.c.bf16 %v932, %v932
        %v935 = vld [vmem:[%s508] sm:$0xf]
        %v937 = vsel %vm673, %v934, 0
        %v940 = vsel %vm677, %v935, 0
        %942 = vmatprep.subr.bf16.mxu0 0
        %943 = vmatpush1.bf16.msra.mxu0 0
        %944 = vmatprep.subr.bf16.mxu0 0
        %945 = vmatpush1.bf16.msra.mxu0 0
        %946 = vmatprep.subr.bf16.mxu0 0
        %947 = vmatpush1.bf16.msra.mxu0 0
        %948 = vmatprep.subr.bf16.mxu0 0
        %949 = vmatpush1.bf16.msra.mxu0 0
        %950 = vmatprep.subr.bf16.mxu0 0
        %951 = vmatpush1.bf16.msra.mxu0 0
        %952 = vmatprep.subr.bf16.mxu0 0
        %953 = vmatpush1.bf16.msra.mxu0 0
        %954 = vmatprep.subr.bf16.mxu0 0
        %955 = vmatpush1.bf16.msra.mxu0 0
        %956 = vmatprep.subr.bf16.mxu0 0
        %957 = vmatpush1.bf16.msra.mxu0 %v940
        %958 = vmatprep.subr.bf16.mxu0 0
        %959 = vmatpush2.bf16.msra.mxu0 0
        %960 = vmatprep.subr.bf16.mxu0 0
        %961 = vmatpush2.bf16.msra.mxu0 0
        %962 = vmatprep.subr.bf16.mxu0 0
        %963 = vmatpush2.bf16.msra.mxu0 0
        %964 = vmatprep.subr.bf16.mxu0 0
        %965 = vmatpush2.bf16.msra.mxu0 0
        %966 = vmatprep.subr.bf16.mxu0 0
        %967 = vmatpush2.bf16.msra.mxu0 0
        %968 = vmatprep.subr.bf16.mxu0 0
        %969 = vmatpush2.bf16.msra.mxu0 0
        %970 = vmatprep.subr.bf16.mxu0 0
        %971 = vmatpush2.bf16.msra.mxu0 0
        %972 = vmatprep.subr.bf16.mxu0 0
        %973 = vmatpush2.bf16.msra.mxu0 0
        %974 = vmatprep.mubr.bf16.mxu0 0
        %975 = vmatmul.mubr.bf16.gmra.mxu0 %v937
        %v976 = vpop.f32.mrf.mxu0
        %v977 = vadd.f32 0.0, %v976
        %v978 = vpop.f32.mrf.mxu0
        %v979 = vpop.f32.mrf.mxu0
        %v980 = vpop.f32.mrf.mxu0
        %981 = vdwg.mxu0
        %v982 = vadd.f32 %v933, %v977
        %983 = vst [vmem:[%s470] sm:$0xff] %v982
        %s984 = sand.u32 %s299, 1
        %s985 = scalar_lea.sflag [#allocation3], %s984
        %s986 = sand.u32 %s299, 1
        %s987 = smul.addr %s986, 8
        %s988 = scalar_lea.vmem [#allocation2], %s987
        // Predicated region
        $region65: #{tpu_custom_call.1} parent=59 // pred_check
          %p989 = pneg %p309
        $region66: #{tpu_custom_call.1} parent=59 // pred_check_branch
          %991 = sbr.rel (%p989) target = $region68
        $region67: #{tpu_custom_call.1} parent=59 // pred_region
          %s993 = ssub.s32 128, 128
          %994 = vsyncadd %s985, %s993
          %s995 = smul.addr %s28, 128
          %s996 = scalar_lea.hbm %s10, %s995
          %s998 = sshll.u32 %s988, 4
          %s999 = int_to_ptr.vmem [resolvable:$true] %s998
          %1001 = dma.vmem_to_hbm [thread:$0]  %s999, 128, %s996, %s985
        $region68: #{tpu_custom_call.1} parent=59 // pred_fallthru
          _
      $region60: #{tpu_custom_call.1} parent=5 // pred_fallthru
        _
      %p1002 = scmp.le.s32.totalorder 2, %s19
      // Predicated region
      $region69: #{tpu_custom_call.1} parent=5 // pred_check
        %p1003 = pneg %p1002
      $region70: #{tpu_custom_call.1} parent=5 // pred_check_branch
        %1005 = sbr.rel (%p1003) target = $region72
      $region71: #{tpu_custom_call.1} parent=5 // pred_region
        %s1006 = ssub.s32 %s19, 2
        // Predicated region
        $region73: #{tpu_custom_call.1} parent=71 // pred_check
          %p1007 = pneg %p315
        $region74: #{tpu_custom_call.1} parent=71 // pred_check_branch
          %1009 = sbr.rel (%p1007) target = $region76
        $region75: #{tpu_custom_call.1} parent=71 // pred_region
          %s1010 = sand.u32 %s300, 1
          %s1011 = scalar_lea.sflag [#allocation3], %s1010
          %s1012 = sand.u32 %s300, 1
          %s1013 = smul.addr %s1012, 8
          %s1014 = scalar_lea.vmem [#allocation2], %s1013
          %1015 = dma.done %s1011, 128
        $region76: #{tpu_custom_call.1} parent=71 // pred_fallthru
          _
      $region72: #{tpu_custom_call.1} parent=5 // pred_fallthru
        _
    $region6: #{tpu_custom_call.1} parent=1 // loop_footer
      %s23 = sadd.s32 1, %s19
    $region7: #{tpu_custom_call.1} parent=1 // loop_footer_branch
      %18 = sbr.rel target = $region3
    $region8: #{tpu_custom_call.1} parent=1 // loop_exit
      _
    %1016 = vsyncpa [#allocation3], 1
    %s1017 = scalar_lea.sflag [#allocation3], 1
    %1018 = vsyncpa %s1017, 1

</llo_original>
